<compile_context>
chip_gen: v5e
topology: v5e:2x2
jax: 0.10.0
libtpu: 0.0.40
codegen_flags: <defaults>
</compile_context>

<pallas_src>
import functools

import jax
import jax.numpy as jnp
from jax import lax
from jax.experimental import pallas as pl
from jax.experimental.pallas import tpu as pltpu

_HIDDEN = 128
_NEG_SLOPE = 0.01  # PyTorch nn.LeakyReLU default

# Compiler-params class name differs across JAX versions; prefer the current one.
_CompilerParams = getattr(pltpu, "CompilerParams", None)
if _CompilerParams is None:  # pragma: no cover - older JAX naming
    _CompilerParams = pltpu.TPUCompilerParams


def _round_up(x, m):
    return (x + m - 1) // m * m


def churn_kernel(x_ref, w1_ref, shift_ref, w3_ref, b3_ref, o_ref):
    # fc1 with BN(eval) scale folded into w1; bf16 operands, f32 accumulate.
    h = jnp.dot(x_ref[...], w1_ref[...], preferred_element_type=jnp.float32)
    # Folded (fc1 bias + BN shift) epilogue, f32.
    h = h + shift_ref[...]                               # (TM, 128)
    # LeakyReLU; Dropout(p=0.3) is identity in eval mode.
    # TODO(synk): training-mode dropout (pltpu.prng_random_bits mask) not implemented.
    h = jnp.where(h > 0, h, _NEG_SLOPE * h)
    # fc3 as a rhs-transposed matvec: (8,128) @ (TM,128)^T -> (8,TM).
    # Row 0 of w3_ref is the real fc3 weight row, rows 1..7 are zero padding
    # (keeps the MXU operand tile-aligned).  Result row 0 lands lane-major, so
    # the store below is a dense (1, TM) slab.
    y = lax.dot_general(
        w3_ref[...], h,
        dimension_numbers=(((1,), (1,)), ((), ())),
        preferred_element_type=jnp.float32,
    )
    o_ref[...] = (y[0:1, :] + b3_ref[0]).astype(o_ref.dtype)


@functools.partial(jax.jit, static_argnames=("block_rows", "matmul_dtype"))
def churn_forward(x, w1, b1, gamma, beta, running_mean, running_var, w3, b3,
                  eps=1e-5, *, block_rows=1024, matmul_dtype=jnp.bfloat16):
    """x: (N, input_dim) float32. Returns (N, 1) float32 logits."""
    n, d = x.shape
    tm = int(block_rows)

    # Fold BatchNorm1d (eval) + fc1 bias:
    #   bn(h) = (h - mean) / sqrt(var+eps) * gamma + beta = h*scale + (beta - mean*scale)
    #   bn(x@w1 + b1) = x @ (w1*scale) + (b1*scale + beta - mean*scale)
    scale = gamma / jnp.sqrt(running_var + eps)                  # (128,)
    shift = beta - running_mean * scale + b1 * scale             # (128,)
    w1_folded = w1 * scale[None, :]                              # (d, 128)

    # Pad batch up to a multiple of the row tile (padded rows sliced off below).
    n_pad = _round_up(n, tm)
    if n_pad != n:
        x = jnp.pad(x, ((0, n_pad - n), (0, 0)))
    g = n_pad // tm

    # bf16 only for the MXU operands; epilogue params stay f32.
    x_c = x.astype(matmul_dtype)
    w1_c = w1_folded.astype(matmul_dtype)
    shift_2d = shift.reshape(1, _HIDDEN).astype(jnp.float32)
    w3_pad = jnp.zeros((8, _HIDDEN), jnp.float32).at[0, :].set(
        w3.reshape(_HIDDEN).astype(jnp.float32))
    b3_s = b3.reshape(1).astype(jnp.float32)                     # SMEM scalar

    out = pl.pallas_call(
        churn_kernel,
        out_shape=jax.ShapeDtypeStruct((1, n_pad), jnp.float32),
        grid=(g,),
        in_specs=[
            pl.BlockSpec((tm, d), lambda i: (i, 0)),          # x: streamed row tiles
            pl.BlockSpec((d, _HIDDEN), lambda i: (0, 0)),     # folded w1: resident
            pl.BlockSpec((1, _HIDDEN), lambda i: (0, 0)),     # folded shift: resident
            pl.BlockSpec((8, _HIDDEN), lambda i: (0, 0)),     # padded w3 row: resident
            pl.BlockSpec(memory_space=pltpu.SMEM),            # b3 scalar in SMEM
        ],
        out_specs=pl.BlockSpec((1, tm), lambda i: (0, i)),    # lane-dense output slab
        compiler_params=_CompilerParams(dimension_semantics=("parallel",)),
    )(x_c, w1_c, shift_2d, w3_pad, b3_s)

    return out.reshape(n_pad, 1)[:n]


def init_params(key, input_dim):
    """Deterministic params mimicking PyTorch shapes (linear weights stored transposed)."""
    k1, k2, k3, k4 = jax.random.split(key, 4)
    bound1 = 1.0 / jnp.sqrt(input_dim)
    w1 = jax.random.uniform(k1, (input_dim, _HIDDEN), jnp.float32, -bound1, bound1)
    b1 = jax.random.uniform(k2, (_HIDDEN,), jnp.float32, -bound1, bound1)

    gamma = jnp.ones((_HIDDEN,), jnp.float32)
    beta = jnp.zeros((_HIDDEN,), jnp.float32)
    running_mean = jnp.zeros((_HIDDEN,), jnp.float32)
    running_var = jnp.ones((_HIDDEN,), jnp.float32)

    bound3 = 1.0 / jnp.sqrt(float(_HIDDEN))
    w3 = jax.random.uniform(k3, (_HIDDEN, 1), jnp.float32, -bound3, bound3)
    b3 = jax.random.uniform(k4, (1,), jnp.float32, -bound3, bound3)

    return w1, b1, gamma, beta, running_mean, running_var, w3, b3


def reference_forward(x, w1, b1, gamma, beta, running_mean, running_var, w3, b3,
                      eps=1e-5):
    """Faithful f32 eval-mode forward (un-fused, matches the PyTorch module)."""
    h = jnp.dot(x, w1, precision="highest") + b1
    h = (h - running_mean) / jnp.sqrt(running_var + eps) * gamma + beta
    h = jnp.where(h > 0, h, _NEG_SLOPE * h)
    return jnp.dot(h, w3, precision="highest") + b3


def reference_forward_matched(x, w1, b1, gamma, beta, running_mean, running_var,
                              w3, b3, eps=1e-5, matmul_dtype=jnp.bfloat16):
    """Reference with the same BN fold + bf16 operand quantization as the kernel."""
    scale = gamma / jnp.sqrt(running_var + eps)
    shift = beta - running_mean * scale + b1 * scale
    xq = x.astype(matmul_dtype).astype(jnp.float32)
    w1q = (w1 * scale[None, :]).astype(matmul_dtype).astype(jnp.float32)
    h = jnp.dot(xq, w1q, precision="highest") + shift
    h = jnp.where(h > 0, h, _NEG_SLOPE * h)
    return jnp.dot(h, w3, precision="highest") + b3


if __name__ == "__main__":
    key = jax.random.PRNGKey(0)
    kx, kp = jax.random.split(key)

    batch, input_dim = 8, 32
    x = jax.random.normal(kx, (batch, input_dim), jnp.float32)
    params = init_params(kp, input_dim)

    out = jax.block_until_ready(churn_forward(x, *params))
    assert out.shape == (batch, 1), out.shape

    # Tight check against a reference that applies the same fold/quantization
    # (validates kernel mechanics), plus a looser check against the faithful
    # f32 module (validates the folding algebra; slack absorbs bf16 operands).
    ref_matched = reference_forward_matched(x, *params)
    ref_f32 = reference_forward(x, *params)
    assert jnp.allclose(out, ref_matched, atol=2e-2, rtol=2e-2), (out, ref_matched)
    assert jnp.allclose(out, ref_f32, atol=5e-2, rtol=5e-2), (out, ref_f32)

    print("KERNEL_OK")
</pallas_src>

<mosaic_0001>
module attributes {stable_mosaic.version = 11 : i64} {
  func.func @churn_kernel(%arg0: i32, %arg1: memref<1024x32xbf16, #tpu.memory_space<vmem>>, %arg2: memref<32x128xbf16, #tpu.memory_space<vmem>>, %arg3: memref<1x128xf32, #tpu.memory_space<vmem>>, %arg4: memref<8x128xf32, #tpu.memory_space<vmem>>, %arg5: memref<1xf32, #tpu.memory_space<smem>>, %arg6: memref<1x1024xf32, #tpu.memory_space<vmem>>) attributes {dimension_semantics = [#tpu.dimension_semantics<parallel>], iteration_bounds = array<i64: 1>, scalar_prefetch = 0 : i64, scratch_operands = 0 : i64, tpu.core_type = #tpu.core_type<tc>, window_params = [{transform_indices = @transform_0, window_bounds = array<i64: 1024, 32>}, {pipeline_mode = #tpu.pipeline_mode<synchronous>, transform_indices = @transform_1, window_bounds = array<i64: 32, 128>}, {pipeline_mode = #tpu.pipeline_mode<synchronous>, transform_indices = @transform_2, window_bounds = array<i64: 1, 128>}, {pipeline_mode = #tpu.pipeline_mode<synchronous>, transform_indices = @transform_3, window_bounds = array<i64: 8, 128>}, {transform_indices = @transform_4, window_bounds = array<i64: 1>}, {transform_indices = @transform_5, window_bounds = array<i64: 1, 1024>}]} {
    %c0 = arith.constant 0 : index
    %c0_0 = arith.constant 0 : index
    %0 = vector.load %arg1[%c0, %c0_0] : memref<1024x32xbf16, #tpu.memory_space<vmem>>, vector<1024x32xbf16>
    %c0_1 = arith.constant 0 : index
    %c0_2 = arith.constant 0 : index
    %1 = vector.load %arg2[%c0_1, %c0_2] : memref<32x128xbf16, #tpu.memory_space<vmem>>, vector<32x128xbf16>
    %cst = arith.constant dense<0.000000e+00> : vector<1024x128xf32>
    %2 = tpu.matmul %0, %1, %cst {dimension_numbers = #tpu.dot_dimension_numbers<[1], [0], [0], [1], [0, 0, 1, 1], [], []>} : vector<1024x32xbf16>, vector<32x128xbf16>, vector<1024x128xf32> -> vector<1024x128xf32>
    %c0_3 = arith.constant 0 : index
    %c0_4 = arith.constant 0 : index
    %3 = vector.load %arg3[%c0_3, %c0_4] : memref<1x128xf32, #tpu.memory_space<vmem>>, vector<1x128xf32>
    %4 = vector.broadcast %3 : vector<1x128xf32> to vector<1024x128xf32>
    %5 = arith.addf %2, %4 : vector<1024x128xf32>
    %cst_5 = arith.constant 0.000000e+00 : f32
    %6 = vector.broadcast %cst_5 : f32 to vector<1024x128xf32>
    %7 = arith.cmpf ogt, %5, %6 : vector<1024x128xf32>
    %cst_6 = arith.constant 0.00999999977 : f32
    %8 = vector.broadcast %cst_6 : f32 to vector<1024x128xf32>
    %9 = arith.mulf %8, %5 : vector<1024x128xf32>
    %10 = arith.select %7, %5, %9 : vector<1024x128xi1>, vector<1024x128xf32>
    %c0_7 = arith.constant 0 : index
    %c0_8 = arith.constant 0 : index
    %11 = vector.load %arg4[%c0_7, %c0_8] : memref<8x128xf32, #tpu.memory_space<vmem>>, vector<8x128xf32>
    %cst_9 = arith.constant dense<0.000000e+00> : vector<8x1024xf32>
    %12 = tpu.matmul %11, %10, %cst_9 {dimension_numbers = #tpu.dot_dimension_numbers<[1], [1], [0], [0], [0, 0, 1, 0], [], []>} : vector<8x128xf32>, vector<1024x128xf32>, vector<8x1024xf32> -> vector<8x1024xf32>
    %13 = vector.extract_strided_slice %12 {offsets = [0, 0], sizes = [1, 1024], strides = [1, 1]} : vector<8x1024xf32> to vector<1x1024xf32>
    %c0_10 = arith.constant 0 : index
    %14 = memref.load %arg5[%c0_10] : memref<1xf32, #tpu.memory_space<smem>>
    %15 = vector.broadcast %14 : f32 to vector<1x1024xf32>
    %16 = arith.addf %13, %15 : vector<1x1024xf32>
    %c0_11 = arith.constant 0 : index
    %c0_12 = arith.constant 0 : index
    %17 = vector.load %arg6[%c0_11, %c0_12] : memref<1x1024xf32, #tpu.memory_space<vmem>>, vector<1x1024xf32>
    tpu.vector_store %arg6[%c0_11, %c0_12], %16 {strides = array<i32>} : memref<1x1024xf32, #tpu.memory_space<vmem>>, vector<1x1024xf32>,
    return
  }
  func.func @transform_0(%arg0: i32) -> (i32, i32) {
    %c0_i32 = arith.constant 0 : i32
    %c0_i32_0 = arith.constant 0 : i32
    return %arg0, %c0_i32 : i32, i32
  }
  func.func @transform_1(%arg0: i32) -> (i32, i32) {
    %c0_i32 = arith.constant 0 : i32
    %c0_i32_0 = arith.constant 0 : i32
    %c0_i32_1 = arith.constant 0 : i32
    return %c0_i32, %c0_i32_0 : i32, i32
  }
  func.func @transform_2(%arg0: i32) -> (i32, i32) {
    %c0_i32 = arith.constant 0 : i32
    %c0_i32_0 = arith.constant 0 : i32
    %c0_i32_1 = arith.constant 0 : i32
    return %c0_i32, %c0_i32_0 : i32, i32
  }
  func.func @transform_3(%arg0: i32) -> (i32, i32) {
    %c0_i32 = arith.constant 0 : i32
    %c0_i32_0 = arith.constant 0 : i32
    %c0_i32_1 = arith.constant 0 : i32
    return %c0_i32, %c0_i32_0 : i32, i32
  }
  func.func @transform_4(%arg0: i32) -> i32 {
    %c0_i32 = arith.constant 0 : i32
    %c0_i32_0 = arith.constant 0 : i32
    return %c0_i32 : i32
  }
  func.func @transform_5(%arg0: i32) -> (i32, i32) {
    %c0_i32 = arith.constant 0 : i32
    %c0_i32_0 = arith.constant 0 : i32
    return %c0_i32, %arg0 : i32, i32
  }
}

</mosaic_0001>

<llo_original>
// kernel: churn_forward.1
$region0: #{churn_forward.1}
  #allocation0 [shape = 'u32[]', space=smem, size = 0x4, offset = 0x4, fixed_abs, tag = 'smem constant byte address 0x4 - core index']
  #allocation1 [shape = 'u32[72,128]{1,0:T(1,128)}', space=vmem, size = 0x9000, scoped, tag = 'internal scratch']
  #allocation2 [shape = 'f32[1]{0:T(128)S(6)}', space=smem, size = 0x200, scoped, tag = 'scoped memory for churn_forward.1']
  %s0 = inlined_call_operand.vmem [shape: bf16[1024,32], index: 0, kind: input, shape index: {}]
  %s1 = inlined_call_operand.vmem [shape: bf16[32,128], index: 1, kind: input, shape index: {}]
  %s2 = inlined_call_operand.vmem [shape: f32[1,128], index: 2, kind: input, shape index: {}]
  %s3 = inlined_call_operand.vmem [shape: f32[8,128], index: 3, kind: input, shape index: {}]
  %s4 = inlined_call_operand.<no memory space> [shape: f32[1], index: 4, kind: input, shape index: {}]
  %s5 = inlined_call_operand.vmem [shape: f32[1,1024], index: 5, kind: output, shape index: {}]
  %s6 = sld [smem:[#allocation0]]
  $region30: #{churn_forward.1} parent=0
    _
  %s8 = ssub.s32 1, %s6
  %s9 = scalar_select 0, %s8, %s6
  %10 = sst [smem:[#allocation2]] %s4
  // Predicated region
  $region2: #{churn_forward.1} parent=0 // pred_check
    _
  $region3: #{churn_forward.1} parent=0 // pred_check_branch
    %12 = sbr.rel (0) target = $region5
  $region4: #{churn_forward.1} parent=0 // pred_region
    _
  $region5: #{churn_forward.1} parent=0 // pred_fallthru
    _
  // Predicated region
  $region6: #{churn_forward.1} parent=0 // pred_check
    _
  $region7: #{churn_forward.1} parent=0 // pred_check_branch
    %14 = sbr.rel (0) target = $region9
  $region8: #{churn_forward.1} parent=0 // pred_region
    _
  $region9: #{churn_forward.1} parent=0 // pred_fallthru
    _
  // Predicated region
  $region10: #{churn_forward.1} parent=0 // pred_check
    _
  $region11: #{churn_forward.1} parent=0 // pred_check_branch
    %16 = sbr.rel (0) target = $region13
  $region12: #{churn_forward.1} parent=0 // pred_region
    _
  $region13: #{churn_forward.1} parent=0 // pred_fallthru
    _
  // Predicated region
  $region14: #{churn_forward.1} parent=0 // pred_check
    _
  $region15: #{churn_forward.1} parent=0 // pred_check_branch
    %18 = sbr.rel (0) target = $region17
  $region16: #{churn_forward.1} parent=0 // pred_region
    _
  $region17: #{churn_forward.1} parent=0 // pred_fallthru
    _
  // Predicated region
  $region18: #{churn_forward.1} parent=0 // pred_check
    _
  $region19: #{churn_forward.1} parent=0 // pred_check_branch
    %20 = sbr.rel (0) target = $region21
  $region20: #{churn_forward.1} parent=0 // pred_region
    _
  $region21: #{churn_forward.1} parent=0 // pred_fallthru
    _
  %v22 = vld [vmem:[%s0] sm:$0xf]
  %v23 = vld [vmem:[%s0 + $0x4] sm:$0xf]
  %v24 = vld [vmem:[%s0 + $0x8] sm:$0xf]
  %v25 = vld [vmem:[%s0 + $0xc] sm:$0xf]
  %v26 = vld [vmem:[%s0 + $0x10] sm:$0xf]
  %v27 = vld [vmem:[%s0 + $0x14] sm:$0xf]
  %v28 = vld [vmem:[%s0 + $0x18] sm:$0xf]
  %v29 = vld [vmem:[%s0 + $0x1c] sm:$0xf]
  %v30 = vld [vmem:[%s0 + $0x20] sm:$0xf]
  %v31 = vld [vmem:[%s0 + $0x24] sm:$0xf]
  %v32 = vld [vmem:[%s0 + $0x28] sm:$0xf]
  %v33 = vld [vmem:[%s0 + $0x2c] sm:$0xf]
  %v34 = vld [vmem:[%s0 + $0x30] sm:$0xf]
  %v35 = vld [vmem:[%s0 + $0x34] sm:$0xf]
  %v36 = vld [vmem:[%s0 + $0x38] sm:$0xf]
  %v37 = vld [vmem:[%s0 + $0x3c] sm:$0xf]
  %v38 = vld [vmem:[%s0 + $0x40] sm:$0xf]
  %v39 = vld [vmem:[%s0 + $0x44] sm:$0xf]
  %v40 = vld [vmem:[%s0 + $0x48] sm:$0xf]
  %v41 = vld [vmem:[%s0 + $0x4c] sm:$0xf]
  %v42 = vld [vmem:[%s0 + $0x50] sm:$0xf]
  %v43 = vld [vmem:[%s0 + $0x54] sm:$0xf]
  %v44 = vld [vmem:[%s0 + $0x58] sm:$0xf]
  %v45 = vld [vmem:[%s0 + $0x5c] sm:$0xf]
  %v46 = vld [vmem:[%s0 + $0x60] sm:$0xf]
  %v47 = vld [vmem:[%s0 + $0x64] sm:$0xf]
  %v48 = vld [vmem:[%s0 + $0x68] sm:$0xf]
  %v49 = vld [vmem:[%s0 + $0x6c] sm:$0xf]
  %v50 = vld [vmem:[%s0 + $0x70] sm:$0xf]
  %v51 = vld [vmem:[%s0 + $0x74] sm:$0xf]
  %v52 = vld [vmem:[%s0 + $0x78] sm:$0xf]
  %v53 = vld [vmem:[%s0 + $0x7c] sm:$0xf]
  %v54 = vld [vmem:[%s0 + $0x80] sm:$0xf]
  %v55 = vld [vmem:[%s0 + $0x84] sm:$0xf]
  %v56 = vld [vmem:[%s0 + $0x88] sm:$0xf]
  %v57 = vld [vmem:[%s0 + $0x8c] sm:$0xf]
  %v58 = vld [vmem:[%s0 + $0x90] sm:$0xf]
  %v59 = vld [vmem:[%s0 + $0x94] sm:$0xf]
  %v60 = vld [vmem:[%s0 + $0x98] sm:$0xf]
  %v61 = vld [vmem:[%s0 + $0x9c] sm:$0xf]
  %v62 = vld [vmem:[%s0 + $0xa0] sm:$0xf]
  %v63 = vld [vmem:[%s0 + $0xa4] sm:$0xf]
  %v64 = vld [vmem:[%s0 + $0xa8] sm:$0xf]
  %v65 = vld [vmem:[%s0 + $0xac] sm:$0xf]
  %v66 = vld [vmem:[%s0 + $0xb0] sm:$0xf]
  %v67 = vld [vmem:[%s0 + $0xb4] sm:$0xf]
  %v68 = vld [vmem:[%s0 + $0xb8] sm:$0xf]
  %v69 = vld [vmem:[%s0 + $0xbc] sm:$0xf]
  %v70 = vld [vmem:[%s0 + $0xc0] sm:$0xf]
  %v71 = vld [vmem:[%s0 + $0xc4] sm:$0xf]
  %v72 = vld [vmem:[%s0 + $0xc8] sm:$0xf]
  %v73 = vld [vmem:[%s0 + $0xcc] sm:$0xf]
  %v74 = vld [vmem:[%s0 + $0xd0] sm:$0xf]
  %v75 = vld [vmem:[%s0 + $0xd4] sm:$0xf]
  %v76 = vld [vmem:[%s0 + $0xd8] sm:$0xf]
  %v77 = vld [vmem:[%s0 + $0xdc] sm:$0xf]
  %v78 = vld [vmem:[%s0 + $0xe0] sm:$0xf]
  %v79 = vld [vmem:[%s0 + $0xe4] sm:$0xf]
  %v80 = vld [vmem:[%s0 + $0xe8] sm:$0xf]
  %v81 = vld [vmem:[%s0 + $0xec] sm:$0xf]
  %v82 = vld [vmem:[%s0 + $0xf0] sm:$0xf]
  %v83 = vld [vmem:[%s0 + $0xf4] sm:$0xf]
  %v84 = vld [vmem:[%s0 + $0xf8] sm:$0xf]
  %v85 = vld [vmem:[%s0 + $0xfc] sm:$0xf]
  %v86 = vld [vmem:[%s0 + $0x100] sm:$0xf]
  %v87 = vld [vmem:[%s0 + $0x104] sm:$0xf]
  %v88 = vld [vmem:[%s0 + $0x108] sm:$0xf]
  %v89 = vld [vmem:[%s0 + $0x10c] sm:$0xf]
  %v90 = vld [vmem:[%s0 + $0x110] sm:$0xf]
  %v91 = vld [vmem:[%s0 + $0x114] sm:$0xf]
  %v92 = vld [vmem:[%s0 + $0x118] sm:$0xf]
  %v93 = vld [vmem:[%s0 + $0x11c] sm:$0xf]
  %v94 = vld [vmem:[%s0 + $0x120] sm:$0xf]
  %v95 = vld [vmem:[%s0 + $0x124] sm:$0xf]
  %v96 = vld [vmem:[%s0 + $0x128] sm:$0xf]
  %v97 = vld [vmem:[%s0 + $0x12c] sm:$0xf]
  %v98 = vld [vmem:[%s0 + $0x130] sm:$0xf]
  %v99 = vld [vmem:[%s0 + $0x134] sm:$0xf]
  %v100 = vld [vmem:[%s0 + $0x138] sm:$0xf]
  %v101 = vld [vmem:[%s0 + $0x13c] sm:$0xf]
  %v102 = vld [vmem:[%s0 + $0x140] sm:$0xf]
  %v103 = vld [vmem:[%s0 + $0x144] sm:$0xf]
  %v104 = vld [vmem:[%s0 + $0x148] sm:$0xf]
  %v105 = vld [vmem:[%s0 + $0x14c] sm:$0xf]
  %v106 = vld [vmem:[%s0 + $0x150] sm:$0xf]
  %v107 = vld [vmem:[%s0 + $0x154] sm:$0xf]
  %v108 = vld [vmem:[%s0 + $0x158] sm:$0xf]
  %v109 = vld [vmem:[%s0 + $0x15c] sm:$0xf]
  %v110 = vld [vmem:[%s0 + $0x160] sm:$0xf]
  %v111 = vld [vmem:[%s0 + $0x164] sm:$0xf]
  %v112 = vld [vmem:[%s0 + $0x168] sm:$0xf]
  %v113 = vld [vmem:[%s0 + $0x16c] sm:$0xf]
  %v114 = vld [vmem:[%s0 + $0x170] sm:$0xf]
  %v115 = vld [vmem:[%s0 + $0x174] sm:$0xf]
  %v116 = vld [vmem:[%s0 + $0x178] sm:$0xf]
  %v117 = vld [vmem:[%s0 + $0x17c] sm:$0xf]
  %v118 = vld [vmem:[%s0 + $0x180] sm:$0xf]
  %v119 = vld [vmem:[%s0 + $0x184] sm:$0xf]
  %v120 = vld [vmem:[%s0 + $0x188] sm:$0xf]
  %v121 = vld [vmem:[%s0 + $0x18c] sm:$0xf]
  %v122 = vld [vmem:[%s0 + $0x190] sm:$0xf]
  %v123 = vld [vmem:[%s0 + $0x194] sm:$0xf]
  %v124 = vld [vmem:[%s0 + $0x198] sm:$0xf]
  %v125 = vld [vmem:[%s0 + $0x19c] sm:$0xf]
  %v126 = vld [vmem:[%s0 + $0x1a0] sm:$0xf]
  %v127 = vld [vmem:[%s0 + $0x1a4] sm:$0xf]
  %v128 = vld [vmem:[%s0 + $0x1a8] sm:$0xf]
  %v129 = vld [vmem:[%s0 + $0x1ac] sm:$0xf]
  %v130 = vld [vmem:[%s0 + $0x1b0] sm:$0xf]
  %v131 = vld [vmem:[%s0 + $0x1b4] sm:$0xf]
  %v132 = vld [vmem:[%s0 + $0x1b8] sm:$0xf]
  %v133 = vld [vmem:[%s0 + $0x1bc] sm:$0xf]
  %v134 = vld [vmem:[%s0 + $0x1c0] sm:$0xf]
  %v135 = vld [vmem:[%s0 + $0x1c4] sm:$0xf]
  %v136 = vld [vmem:[%s0 + $0x1c8] sm:$0xf]
  %v137 = vld [vmem:[%s0 + $0x1cc] sm:$0xf]
  %v138 = vld [vmem:[%s0 + $0x1d0] sm:$0xf]
  %v139 = vld [vmem:[%s0 + $0x1d4] sm:$0xf]
  %v140 = vld [vmem:[%s0 + $0x1d8] sm:$0xf]
  %v141 = vld [vmem:[%s0 + $0x1dc] sm:$0xf]
  %v142 = vld [vmem:[%s0 + $0x1e0] sm:$0xf]
  %v143 = vld [vmem:[%s0 + $0x1e4] sm:$0xf]
  %v144 = vld [vmem:[%s0 + $0x1e8] sm:$0xf]
  %v145 = vld [vmem:[%s0 + $0x1ec] sm:$0xf]
  %v146 = vld [vmem:[%s0 + $0x1f0] sm:$0xf]
  %v147 = vld [vmem:[%s0 + $0x1f4] sm:$0xf]
  %v148 = vld [vmem:[%s0 + $0x1f8] sm:$0xf]
  %v149 = vld [vmem:[%s0 + $0x1fc] sm:$0xf]
  %v150 = vld [vmem:[%s1] sm:$0xf]
  %v151 = vld [vmem:[%s1 + $0x4] sm:$0xf]
  %v152 = vld [vmem:[%s1 + $0x8] sm:$0xf]
  %v153 = vld [vmem:[%s1 + $0xc] sm:$0xf]
  %v154 = vld [vmem:[%s2] sm:$0x1]
  %v156 = vperm.slane %v154, 0
  %v286 = vunpack.c.l.b16 %v22
  %v287 = vunpack.c.l.b16 %v23
  %v288 = vunpack.c.l.b16 %v24
  %v289 = vunpack.c.l.b16 %v25
  %v290 = vunpack.c.l.b16 %v26
  %v291 = vunpack.c.l.b16 %v27
  %v292 = vunpack.c.l.b16 %v28
  %v293 = vunpack.c.l.b16 %v29
  %v294 = vunpack.c.l.b16 %v30
  %v295 = vunpack.c.l.b16 %v31
  %v296 = vunpack.c.l.b16 %v32
  %v297 = vunpack.c.l.b16 %v33
  %v298 = vunpack.c.l.b16 %v34
  %v299 = vunpack.c.l.b16 %v35
  %v300 = vunpack.c.l.b16 %v36
  %v301 = vunpack.c.l.b16 %v37
  %v302 = vunpack.c.l.b16 %v38
  %v303 = vunpack.c.l.b16 %v39
  %v304 = vunpack.c.l.b16 %v40
  %v305 = vunpack.c.l.b16 %v41
  %v306 = vunpack.c.l.b16 %v42
  %v307 = vunpack.c.l.b16 %v43
  %v308 = vunpack.c.l.b16 %v44
  %v309 = vunpack.c.l.b16 %v45
  %v310 = vunpack.c.l.b16 %v46
  %v311 = vunpack.c.l.b16 %v47
  %v312 = vunpack.c.l.b16 %v48
  %v313 = vunpack.c.l.b16 %v49
  %v314 = vunpack.c.l.b16 %v50
  %v315 = vunpack.c.l.b16 %v51
  %v316 = vunpack.c.l.b16 %v52
  %v317 = vunpack.c.l.b16 %v53
  %v318 = vunpack.c.l.b16 %v54
  %v319 = vunpack.c.l.b16 %v55
  %v320 = vunpack.c.l.b16 %v56
  %v321 = vunpack.c.l.b16 %v57
  %v322 = vunpack.c.l.b16 %v58
  %v323 = vunpack.c.l.b16 %v59
  %v324 = vunpack.c.l.b16 %v60
  %v325 = vunpack.c.l.b16 %v61
  %v326 = vunpack.c.l.b16 %v62
  %v327 = vunpack.c.l.b16 %v63
  %v328 = vunpack.c.l.b16 %v64
  %v329 = vunpack.c.l.b16 %v65
  %v330 = vunpack.c.l.b16 %v66
  %v331 = vunpack.c.l.b16 %v67
  %v332 = vunpack.c.l.b16 %v68
  %v333 = vunpack.c.l.b16 %v69
  %v334 = vunpack.c.l.b16 %v70
  %v335 = vunpack.c.l.b16 %v71
  %v336 = vunpack.c.l.b16 %v72
  %v337 = vunpack.c.l.b16 %v73
  %v338 = vunpack.c.l.b16 %v74
  %v339 = vunpack.c.l.b16 %v75
  %v340 = vunpack.c.l.b16 %v76
  %v341 = vunpack.c.l.b16 %v77
  %v342 = vunpack.c.l.b16 %v78
  %v343 = vunpack.c.l.b16 %v79
  %v344 = vunpack.c.l.b16 %v80
  %v345 = vunpack.c.l.b16 %v81
  %v346 = vunpack.c.l.b16 %v82
  %v347 = vunpack.c.l.b16 %v83
  %v348 = vunpack.c.l.b16 %v84
  %v349 = vunpack.c.l.b16 %v85
  %v350 = vunpack.c.l.b16 %v86
  %v351 = vunpack.c.l.b16 %v87
  %v352 = vunpack.c.l.b16 %v88
  %v353 = vunpack.c.l.b16 %v89
  %v354 = vunpack.c.l.b16 %v90
  %v355 = vunpack.c.l.b16 %v91
  %v356 = vunpack.c.l.b16 %v92
  %v357 = vunpack.c.l.b16 %v93
  %v358 = vunpack.c.l.b16 %v94
  %v359 = vunpack.c.l.b16 %v95
  %v360 = vunpack.c.l.b16 %v96
  %v361 = vunpack.c.l.b16 %v97
  %v362 = vunpack.c.l.b16 %v98
  %v363 = vunpack.c.l.b16 %v99
  %v364 = vunpack.c.l.b16 %v100
  %v365 = vunpack.c.l.b16 %v101
  %v366 = vunpack.c.l.b16 %v102
  %v367 = vunpack.c.l.b16 %v103
  %v368 = vunpack.c.l.b16 %v104
  %v369 = vunpack.c.l.b16 %v105
  %v370 = vunpack.c.l.b16 %v106
  %v371 = vunpack.c.l.b16 %v107
  %v372 = vunpack.c.l.b16 %v108
  %v373 = vunpack.c.l.b16 %v109
  %v374 = vunpack.c.l.b16 %v110
  %v375 = vunpack.c.l.b16 %v111
  %v376 = vunpack.c.l.b16 %v112
  %v377 = vunpack.c.l.b16 %v113
  %v378 = vunpack.c.l.b16 %v114
  %v379 = vunpack.c.l.b16 %v115
  %v380 = vunpack.c.l.b16 %v116
  %v381 = vunpack.c.l.b16 %v117
  %v382 = vunpack.c.l.b16 %v118
  %v383 = vunpack.c.l.b16 %v119
  %v384 = vunpack.c.l.b16 %v120
  %v385 = vunpack.c.l.b16 %v121
  %v386 = vunpack.c.l.b16 %v122
  %v387 = vunpack.c.l.b16 %v123
  %v388 = vunpack.c.l.b16 %v124
  %v389 = vunpack.c.l.b16 %v125
  %v390 = vunpack.c.l.b16 %v126
  %v391 = vunpack.c.l.b16 %v127
  %v392 = vunpack.c.l.b16 %v128
  %v393 = vunpack.c.l.b16 %v129
  %v394 = vunpack.c.l.b16 %v130
  %v395 = vunpack.c.l.b16 %v131
  %v396 = vunpack.c.l.b16 %v132
  %v397 = vunpack.c.l.b16 %v133
  %v398 = vunpack.c.l.b16 %v134
  %v399 = vunpack.c.l.b16 %v135
  %v400 = vunpack.c.l.b16 %v136
  %v401 = vunpack.c.l.b16 %v137
  %v402 = vunpack.c.l.b16 %v138
  %v403 = vunpack.c.l.b16 %v139
  %v404 = vunpack.c.l.b16 %v140
  %v405 = vunpack.c.l.b16 %v141
  %v406 = vunpack.c.l.b16 %v142
  %v407 = vunpack.c.l.b16 %v143
  %v408 = vunpack.c.l.b16 %v144
  %v409 = vunpack.c.l.b16 %v145
  %v410 = vunpack.c.l.b16 %v146
  %v411 = vunpack.c.l.b16 %v147
  %v412 = vunpack.c.l.b16 %v148
  %v413 = vunpack.c.l.b16 %v149
  %v414 = vpack.c.b16 %v287, %v286
  %v415 = vpack.c.b16 %v289, %v288
  %v416 = vpack.c.b16 %v291, %v290
  %v417 = vpack.c.b16 %v293, %v292
  %v418 = vpack.c.b16 %v295, %v294
  %v419 = vpack.c.b16 %v297, %v296
  %v420 = vpack.c.b16 %v299, %v298
  %v421 = vpack.c.b16 %v301, %v300
  %v422 = vpack.c.b16 %v303, %v302
  %v423 = vpack.c.b16 %v305, %v304
  %v424 = vpack.c.b16 %v307, %v306
  %v425 = vpack.c.b16 %v309, %v308
  %v426 = vpack.c.b16 %v311, %v310
  %v427 = vpack.c.b16 %v313, %v312
  %v428 = vpack.c.b16 %v315, %v314
  %v429 = vpack.c.b16 %v317, %v316
  %v430 = vpack.c.b16 %v319, %v318
  %v431 = vpack.c.b16 %v321, %v320
  %v432 = vpack.c.b16 %v323, %v322
  %v433 = vpack.c.b16 %v325, %v324
  %v434 = vpack.c.b16 %v327, %v326
  %v435 = vpack.c.b16 %v329, %v328
  %v436 = vpack.c.b16 %v331, %v330
  %v437 = vpack.c.b16 %v333, %v332
  %v438 = vpack.c.b16 %v335, %v334
  %v439 = vpack.c.b16 %v337, %v336
  %v440 = vpack.c.b16 %v339, %v338
  %v441 = vpack.c.b16 %v341, %v340
  %v442 = vpack.c.b16 %v343, %v342
  %v443 = vpack.c.b16 %v345, %v344
  %v444 = vpack.c.b16 %v347, %v346
  %v445 = vpack.c.b16 %v349, %v348
  %v446 = vpack.c.b16 %v351, %v350
  %v447 = vpack.c.b16 %v353, %v352
  %v448 = vpack.c.b16 %v355, %v354
  %v449 = vpack.c.b16 %v357, %v356
  %v450 = vpack.c.b16 %v359, %v358
  %v451 = vpack.c.b16 %v361, %v360
  %v452 = vpack.c.b16 %v363, %v362
  %v453 = vpack.c.b16 %v365, %v364
  %v454 = vpack.c.b16 %v367, %v366
  %v455 = vpack.c.b16 %v369, %v368
  %v456 = vpack.c.b16 %v371, %v370
  %v457 = vpack.c.b16 %v373, %v372
  %v458 = vpack.c.b16 %v375, %v374
  %v459 = vpack.c.b16 %v377, %v376
  %v460 = vpack.c.b16 %v379, %v378
  %v461 = vpack.c.b16 %v381, %v380
  %v462 = vpack.c.b16 %v383, %v382
  %v463 = vpack.c.b16 %v385, %v384
  %v464 = vpack.c.b16 %v387, %v386
  %v465 = vpack.c.b16 %v389, %v388
  %v466 = vpack.c.b16 %v391, %v390
  %v467 = vpack.c.b16 %v393, %v392
  %v468 = vpack.c.b16 %v395, %v394
  %v469 = vpack.c.b16 %v397, %v396
  %v470 = vpack.c.b16 %v399, %v398
  %v471 = vpack.c.b16 %v401, %v400
  %v472 = vpack.c.b16 %v403, %v402
  %v473 = vpack.c.b16 %v405, %v404
  %v474 = vpack.c.b16 %v407, %v406
  %v475 = vpack.c.b16 %v409, %v408
  %v476 = vpack.c.b16 %v411, %v410
  %v477 = vpack.c.b16 %v413, %v412
  %v482 = vunpack.c.l.b16 %v150
  %v483 = vunpack.c.l.b16 %v151
  %v484 = vunpack.c.l.b16 %v152
  %v485 = vunpack.c.l.b16 %v153
  %v486 = vpack.c.b16 %v483, %v482
  %v487 = vpack.c.b16 %v485, %v484
  %vm490 = vcmask 261120
  %v492 = vsel %vm490, %v414, 0
  %v495 = vsel %vm490, %v415, 0
  %v498 = vsel %vm490, %v416, 0
  %v501 = vsel %vm490, %v417, 0
  %v504 = vsel %vm490, %v418, 0
  %v507 = vsel %vm490, %v419, 0
  %v510 = vsel %vm490, %v420, 0
  %v513 = vsel %vm490, %v421, 0
  %v516 = vsel %vm490, %v422, 0
  %v519 = vsel %vm490, %v423, 0
  %v522 = vsel %vm490, %v424, 0
  %v525 = vsel %vm490, %v425, 0
  %v528 = vsel %vm490, %v426, 0
  %v531 = vsel %vm490, %v427, 0
  %v534 = vsel %vm490, %v428, 0
  %v537 = vsel %vm490, %v429, 0
  %v540 = vsel %vm490, %v430, 0
  %v543 = vsel %vm490, %v431, 0
  %v546 = vsel %vm490, %v432, 0
  %v549 = vsel %vm490, %v433, 0
  %v552 = vsel %vm490, %v434, 0
  %v555 = vsel %vm490, %v435, 0
  %v558 = vsel %vm490, %v436, 0
  %v561 = vsel %vm490, %v437, 0
  %v564 = vsel %vm490, %v438, 0
  %v567 = vsel %vm490, %v439, 0
  %v570 = vsel %vm490, %v440, 0
  %v573 = vsel %vm490, %v441, 0
  %v576 = vsel %vm490, %v442, 0
  %v579 = vsel %vm490, %v443, 0
  %v582 = vsel %vm490, %v444, 0
  %v585 = vsel %vm490, %v445, 0
  %v588 = vsel %vm490, %v446, 0
  %v591 = vsel %vm490, %v447, 0
  %v594 = vsel %vm490, %v448, 0
  %v597 = vsel %vm490, %v449, 0
  %v600 = vsel %vm490, %v450, 0
  %v603 = vsel %vm490, %v451, 0
  %v606 = vsel %vm490, %v452, 0
  %v609 = vsel %vm490, %v453, 0
  %v612 = vsel %vm490, %v454, 0
  %v615 = vsel %vm490, %v455, 0
  %v618 = vsel %vm490, %v456, 0
  %v621 = vsel %vm490, %v457, 0
  %v624 = vsel %vm490, %v458, 0
  %v627 = vsel %vm490, %v459, 0
  %v630 = vsel %vm490, %v460, 0
  %v633 = vsel %vm490, %v461, 0
  %v636 = vsel %vm490, %v462, 0
  %v639 = vsel %vm490, %v463, 0
  %v642 = vsel %vm490, %v464, 0
  %v645 = vsel %vm490, %v465, 0
  %v648 = vsel %vm490, %v466, 0
  %v651 = vsel %vm490, %v467, 0
  %v654 = vsel %vm490, %v468, 0
  %v657 = vsel %vm490, %v469, 0
  %v660 = vsel %vm490, %v470, 0
  %v663 = vsel %vm490, %v471, 0
  %v666 = vsel %vm490, %v472, 0
  %v669 = vsel %vm490, %v473, 0
  %v672 = vsel %vm490, %v474, 0
  %v675 = vsel %vm490, %v475, 0
  %v678 = vsel %vm490, %v476, 0
  %v681 = vsel %vm490, %v477, 0
  %683 = vmatpush.bf16.msra.mxu0 0
  %684 = vmatpush.bf16.msra.mxu0 0
  %685 = vmatpush.bf16.msra.mxu0 0
  %686 = vmatpush.bf16.msra.mxu0 0
  %687 = vmatpush.bf16.msra.mxu0 0
  %688 = vmatpush.bf16.msra.mxu0 0
  %689 = vmatpush.bf16.msra.mxu0 %v487
  %690 = vmatpush.bf16.msra.mxu0 %v486
  %691 = vmatmul.bf16.gmra.mxu0 %v492
  %v692 = vpop.f32.mrf.mxu0
  %v693 = vadd.f32 %v156, %v692
  %v694 = vpop.f32.mrf.mxu0
  %v695 = vadd.f32 %v156, %v694
  %696 = vmatmul.bf16.gmra.mxu0 %v495
  %v697 = vpop.f32.mrf.mxu0
  %v698 = vadd.f32 %v156, %v697
  %v699 = vpop.f32.mrf.mxu0
  %v700 = vadd.f32 %v156, %v699
  %701 = vmatmul.bf16.gmra.mxu0 %v498
  %v702 = vpop.f32.mrf.mxu0
  %v703 = vadd.f32 %v156, %v702
  %v704 = vpop.f32.mrf.mxu0
  %v705 = vadd.f32 %v156, %v704
  %706 = vmatmul.bf16.gmra.mxu0 %v501
  %v707 = vpop.f32.mrf.mxu0
  %v708 = vadd.f32 %v156, %v707
  %v709 = vpop.f32.mrf.mxu0
  %v710 = vadd.f32 %v156, %v709
  %711 = vmatmul.bf16.gmra.mxu0 %v504
  %v712 = vpop.f32.mrf.mxu0
  %v713 = vadd.f32 %v156, %v712
  %v714 = vpop.f32.mrf.mxu0
  %v715 = vadd.f32 %v156, %v714
  %716 = vmatmul.bf16.gmra.mxu0 %v507
  %v717 = vpop.f32.mrf.mxu0
  %v718 = vadd.f32 %v156, %v717
  %v719 = vpop.f32.mrf.mxu0
  %v720 = vadd.f32 %v156, %v719
  %721 = vmatmul.bf16.gmra.mxu0 %v510
  %v722 = vpop.f32.mrf.mxu0
  %v723 = vadd.f32 %v156, %v722
  %v724 = vpop.f32.mrf.mxu0
  %v725 = vadd.f32 %v156, %v724
  %726 = vmatmul.bf16.gmra.mxu0 %v513
  %v727 = vpop.f32.mrf.mxu0
  %v728 = vadd.f32 %v156, %v727
  %v729 = vpop.f32.mrf.mxu0
  %v730 = vadd.f32 %v156, %v729
  %731 = vmatmul.bf16.gmra.mxu0 %v516
  %v732 = vpop.f32.mrf.mxu0
  %v733 = vadd.f32 %v156, %v732
  %v734 = vpop.f32.mrf.mxu0
  %v735 = vadd.f32 %v156, %v734
  %736 = vmatmul.bf16.gmra.mxu0 %v519
  %v737 = vpop.f32.mrf.mxu0
  %v738 = vadd.f32 %v156, %v737
  %v739 = vpop.f32.mrf.mxu0
  %v740 = vadd.f32 %v156, %v739
  %741 = vmatmul.bf16.gmra.mxu0 %v522
  %v742 = vpop.f32.mrf.mxu0
  %v743 = vadd.f32 %v156, %v742
  %v744 = vpop.f32.mrf.mxu0
  %v745 = vadd.f32 %v156, %v744
  %746 = vmatmul.bf16.gmra.mxu0 %v525
  %v747 = vpop.f32.mrf.mxu0
  %v748 = vadd.f32 %v156, %v747
  %v749 = vpop.f32.mrf.mxu0
  %v750 = vadd.f32 %v156, %v749
  %751 = vmatmul.bf16.gmra.mxu0 %v528
  %v752 = vpop.f32.mrf.mxu0
  %v753 = vadd.f32 %v156, %v752
  %v754 = vpop.f32.mrf.mxu0
  %v755 = vadd.f32 %v156, %v754
  %756 = vmatmul.bf16.gmra.mxu0 %v531
  %v757 = vpop.f32.mrf.mxu0
  %v758 = vadd.f32 %v156, %v757
  %v759 = vpop.f32.mrf.mxu0
  %v760 = vadd.f32 %v156, %v759
  %761 = vmatmul.bf16.gmra.mxu0 %v534
  %v762 = vpop.f32.mrf.mxu0
  %v763 = vadd.f32 %v156, %v762
  %v764 = vpop.f32.mrf.mxu0
  %v765 = vadd.f32 %v156, %v764
  %766 = vmatmul.bf16.gmra.mxu0 %v537
  %v767 = vpop.f32.mrf.mxu0
  %v768 = vadd.f32 %v156, %v767
  %v769 = vpop.f32.mrf.mxu0
  %v770 = vadd.f32 %v156, %v769
  %771 = vmatmul.bf16.gmra.mxu0 %v540
  %v772 = vpop.f32.mrf.mxu0
  %v773 = vadd.f32 %v156, %v772
  %v774 = vpop.f32.mrf.mxu0
  %v775 = vadd.f32 %v156, %v774
  %776 = vmatmul.bf16.gmra.mxu0 %v543
  %v777 = vpop.f32.mrf.mxu0
  %v778 = vadd.f32 %v156, %v777
  %v779 = vpop.f32.mrf.mxu0
  %v780 = vadd.f32 %v156, %v779
  %781 = vmatmul.bf16.gmra.mxu0 %v546
  %v782 = vpop.f32.mrf.mxu0
  %v783 = vadd.f32 %v156, %v782
  %v784 = vpop.f32.mrf.mxu0
  %v785 = vadd.f32 %v156, %v784
  %786 = vmatmul.bf16.gmra.mxu0 %v549
  %v787 = vpop.f32.mrf.mxu0
  %v788 = vadd.f32 %v156, %v787
  %v789 = vpop.f32.mrf.mxu0
  %v790 = vadd.f32 %v156, %v789
  %791 = vmatmul.bf16.gmra.mxu0 %v552
  %v792 = vpop.f32.mrf.mxu0
  %v793 = vadd.f32 %v156, %v792
  %v794 = vpop.f32.mrf.mxu0
  %v795 = vadd.f32 %v156, %v794
  %796 = vmatmul.bf16.gmra.mxu0 %v555
  %v797 = vpop.f32.mrf.mxu0
  %v798 = vadd.f32 %v156, %v797
  %v799 = vpop.f32.mrf.mxu0
  %v800 = vadd.f32 %v156, %v799
  %801 = vmatmul.bf16.gmra.mxu0 %v558
  %v802 = vpop.f32.mrf.mxu0
  %v803 = vadd.f32 %v156, %v802
  %v804 = vpop.f32.mrf.mxu0
  %v805 = vadd.f32 %v156, %v804
  %806 = vmatmul.bf16.gmra.mxu0 %v561
  %v807 = vpop.f32.mrf.mxu0
  %v808 = vadd.f32 %v156, %v807
  %v809 = vpop.f32.mrf.mxu0
  %v810 = vadd.f32 %v156, %v809
  %811 = vmatmul.bf16.gmra.mxu0 %v564
  %v812 = vpop.f32.mrf.mxu0
  %v813 = vadd.f32 %v156, %v812
  %v814 = vpop.f32.mrf.mxu0
  %v815 = vadd.f32 %v156, %v814
  %816 = vmatmul.bf16.gmra.mxu0 %v567
  %v817 = vpop.f32.mrf.mxu0
  %v818 = vadd.f32 %v156, %v817
  %v819 = vpop.f32.mrf.mxu0
  %v820 = vadd.f32 %v156, %v819
  %821 = vmatmul.bf16.gmra.mxu0 %v570
  %v822 = vpop.f32.mrf.mxu0
  %v823 = vadd.f32 %v156, %v822
  %v824 = vpop.f32.mrf.mxu0
  %v825 = vadd.f32 %v156, %v824
  %826 = vmatmul.bf16.gmra.mxu0 %v573
  %v827 = vpop.f32.mrf.mxu0
  %v828 = vadd.f32 %v156, %v827
  %v829 = vpop.f32.mrf.mxu0
  %v830 = vadd.f32 %v156, %v829
  %831 = vmatmul.bf16.gmra.mxu0 %v576
  %v832 = vpop.f32.mrf.mxu0
  %v833 = vadd.f32 %v156, %v832
  %v834 = vpop.f32.mrf.mxu0
  %v835 = vadd.f32 %v156, %v834
  %836 = vmatmul.bf16.gmra.mxu0 %v579
  %v837 = vpop.f32.mrf.mxu0
  %v838 = vadd.f32 %v156, %v837
  %v839 = vpop.f32.mrf.mxu0
  %v840 = vadd.f32 %v156, %v839
  %841 = vmatmul.bf16.gmra.mxu0 %v582
  %v842 = vpop.f32.mrf.mxu0
  %v843 = vadd.f32 %v156, %v842
  %v844 = vpop.f32.mrf.mxu0
  %v845 = vadd.f32 %v156, %v844
  %846 = vmatmul.bf16.gmra.mxu0 %v585
  %v847 = vpop.f32.mrf.mxu0
  %v848 = vadd.f32 %v156, %v847
  %v849 = vpop.f32.mrf.mxu0
  %v850 = vadd.f32 %v156, %v849
  %851 = vmatmul.bf16.gmra.mxu0 %v588
  %v852 = vpop.f32.mrf.mxu0
  %v853 = vadd.f32 %v156, %v852
  %v854 = vpop.f32.mrf.mxu0
  %v855 = vadd.f32 %v156, %v854
  %856 = vmatmul.bf16.gmra.mxu0 %v591
  %v857 = vpop.f32.mrf.mxu0
  %v858 = vadd.f32 %v156, %v857
  %v859 = vpop.f32.mrf.mxu0
  %v860 = vadd.f32 %v156, %v859
  %861 = vmatmul.bf16.gmra.mxu0 %v594
  %v862 = vpop.f32.mrf.mxu0
  %v863 = vadd.f32 %v156, %v862
  %v864 = vpop.f32.mrf.mxu0
  %v865 = vadd.f32 %v156, %v864
  %866 = vmatmul.bf16.gmra.mxu0 %v597
  %v867 = vpop.f32.mrf.mxu0
  %v868 = vadd.f32 %v156, %v867
  %v869 = vpop.f32.mrf.mxu0
  %v870 = vadd.f32 %v156, %v869
  %871 = vmatmul.bf16.gmra.mxu0 %v600
  %v872 = vpop.f32.mrf.mxu0
  %v873 = vadd.f32 %v156, %v872
  %v874 = vpop.f32.mrf.mxu0
  %v875 = vadd.f32 %v156, %v874
  %876 = vmatmul.bf16.gmra.mxu0 %v603
  %v877 = vpop.f32.mrf.mxu0
  %v878 = vadd.f32 %v156, %v877
  %v879 = vpop.f32.mrf.mxu0
  %v880 = vadd.f32 %v156, %v879
  %881 = vmatmul.bf16.gmra.mxu0 %v606
  %v882 = vpop.f32.mrf.mxu0
  %v883 = vadd.f32 %v156, %v882
  %v884 = vpop.f32.mrf.mxu0
  %v885 = vadd.f32 %v156, %v884
  %886 = vmatmul.bf16.gmra.mxu0 %v609
  %v887 = vpop.f32.mrf.mxu0
  %v888 = vadd.f32 %v156, %v887
  %v889 = vpop.f32.mrf.mxu0
  %v890 = vadd.f32 %v156, %v889
  %891 = vmatmul.bf16.gmra.mxu0 %v612
  %v892 = vpop.f32.mrf.mxu0
  %v893 = vadd.f32 %v156, %v892
  %v894 = vpop.f32.mrf.mxu0
  %v895 = vadd.f32 %v156, %v894
  %896 = vmatmul.bf16.gmra.mxu0 %v615
  %v897 = vpop.f32.mrf.mxu0
  %v898 = vadd.f32 %v156, %v897
  %v899 = vpop.f32.mrf.mxu0
  %v900 = vadd.f32 %v156, %v899
  %901 = vmatmul.bf16.gmra.mxu0 %v618
  %v902 = vpop.f32.mrf.mxu0
  %v903 = vadd.f32 %v156, %v902
  %v904 = vpop.f32.mrf.mxu0
  %v905 = vadd.f32 %v156, %v904
  %906 = vmatmul.bf16.gmra.mxu0 %v621
  %v907 = vpop.f32.mrf.mxu0
  %v908 = vadd.f32 %v156, %v907
  %v909 = vpop.f32.mrf.mxu0
  %v910 = vadd.f32 %v156, %v909
  %911 = vmatmul.bf16.gmra.mxu0 %v624
  %v912 = vpop.f32.mrf.mxu0
  %v913 = vadd.f32 %v156, %v912
  %v914 = vpop.f32.mrf.mxu0
  %v915 = vadd.f32 %v156, %v914
  %916 = vmatmul.bf16.gmra.mxu0 %v627
  %v917 = vpop.f32.mrf.mxu0
  %v918 = vadd.f32 %v156, %v917
  %v919 = vpop.f32.mrf.mxu0
  %v920 = vadd.f32 %v156, %v919
  %921 = vmatmul.bf16.gmra.mxu0 %v630
  %v922 = vpop.f32.mrf.mxu0
  %v923 = vadd.f32 %v156, %v922
  %v924 = vpop.f32.mrf.mxu0
  %v925 = vadd.f32 %v156, %v924
  %926 = vmatmul.bf16.gmra.mxu0 %v633
  %v927 = vpop.f32.mrf.mxu0
  %v928 = vadd.f32 %v156, %v927
  %v929 = vpop.f32.mrf.mxu0
  %v930 = vadd.f32 %v156, %v929
  %931 = vmatmul.bf16.gmra.mxu0 %v636
  %v932 = vpop.f32.mrf.mxu0
  %v933 = vadd.f32 %v156, %v932
  %v934 = vpop.f32.mrf.mxu0
  %v935 = vadd.f32 %v156, %v934
  %936 = vmatmul.bf16.gmra.mxu0 %v639
  %v937 = vpop.f32.mrf.mxu0
  %v938 = vadd.f32 %v156, %v937
  %v939 = vpop.f32.mrf.mxu0
  %v940 = vadd.f32 %v156, %v939
  %941 = vmatmul.bf16.gmra.mxu0 %v642
  %v942 = vpop.f32.mrf.mxu0
  %v943 = vadd.f32 %v156, %v942
  %v944 = vpop.f32.mrf.mxu0
  %v945 = vadd.f32 %v156, %v944
  %946 = vmatmul.bf16.gmra.mxu0 %v645
  %v947 = vpop.f32.mrf.mxu0
  %v948 = vadd.f32 %v156, %v947
  %v949 = vpop.f32.mrf.mxu0
  %v950 = vadd.f32 %v156, %v949
  %951 = vmatmul.bf16.gmra.mxu0 %v648
  %v952 = vpop.f32.mrf.mxu0
  %v953 = vadd.f32 %v156, %v952
  %v954 = vpop.f32.mrf.mxu0
  %v955 = vadd.f32 %v156, %v954
  %956 = vmatmul.bf16.gmra.mxu0 %v651
  %v957 = vpop.f32.mrf.mxu0
  %v958 = vadd.f32 %v156, %v957
  %v959 = vpop.f32.mrf.mxu0
  %v960 = vadd.f32 %v156, %v959
  %961 = vmatmul.bf16.gmra.mxu0 %v654
  %v962 = vpop.f32.mrf.mxu0
  %v963 = vadd.f32 %v156, %v962
  %v964 = vpop.f32.mrf.mxu0
  %v965 = vadd.f32 %v156, %v964
  %966 = vmatmul.bf16.gmra.mxu0 %v657
  %v967 = vpop.f32.mrf.mxu0
  %v968 = vadd.f32 %v156, %v967
  %v969 = vpop.f32.mrf.mxu0
  %v970 = vadd.f32 %v156, %v969
  %971 = vmatmul.bf16.gmra.mxu0 %v660
  %v972 = vpop.f32.mrf.mxu0
  %v973 = vadd.f32 %v156, %v972
  %v974 = vpop.f32.mrf.mxu0
  %v975 = vadd.f32 %v156, %v974
  %976 = vmatmul.bf16.gmra.mxu0 %v663
  %v977 = vpop.f32.mrf.mxu0
  %v978 = vadd.f32 %v156, %v977
  %v979 = vpop.f32.mrf.mxu0
  %v980 = vadd.f32 %v156, %v979
  %981 = vmatmul.bf16.gmra.mxu0 %v666
  %v982 = vpop.f32.mrf.mxu0
  %v983 = vadd.f32 %v156, %v982
  %v984 = vpop.f32.mrf.mxu0
  %v985 = vadd.f32 %v156, %v984
  %986 = vmatmul.bf16.gmra.mxu0 %v669
  %v987 = vpop.f32.mrf.mxu0
  %v988 = vadd.f32 %v156, %v987
  %v989 = vpop.f32.mrf.mxu0
  %v990 = vadd.f32 %v156, %v989
  %991 = vmatmul.bf16.gmra.mxu0 %v672
  %v992 = vpop.f32.mrf.mxu0
  %v993 = vadd.f32 %v156, %v992
  %v994 = vpop.f32.mrf.mxu0
  %v995 = vadd.f32 %v156, %v994
  %996 = vmatmul.bf16.gmra.mxu0 %v675
  %v997 = vpop.f32.mrf.mxu0
  %v998 = vadd.f32 %v156, %v997
  %v999 = vpop.f32.mrf.mxu0
  %v1000 = vadd.f32 %v156, %v999
  %1001 = vmatmul.bf16.gmra.mxu0 %v678
  %v1002 = vpop.f32.mrf.mxu0
  %v1003 = vadd.f32 %v156, %v1002
  %v1004 = vpop.f32.mrf.mxu0
  %v1005 = vadd.f32 %v156, %v1004
  %1006 = vmatmul.bf16.gmra.mxu0 %v681
  %v1007 = vpop.f32.mrf.mxu0
  %v1008 = vadd.f32 %v156, %v1007
  %v1009 = vpop.f32.mrf.mxu0
  %v1010 = vadd.f32 %v156, %v1009
  %1011 = vdwg.mxu0
  %vm1012 = vcmp.gt.f32.partialorder %v693, 0.0
  %vm1013 = vcmp.gt.f32.partialorder %v695, 0.0
  %vm1014 = vcmp.gt.f32.partialorder %v698, 0.0
  %vm1015 = vcmp.gt.f32.partialorder %v700, 0.0
  %vm1016 = vcmp.gt.f32.partialorder %v703, 0.0
  %vm1017 = vcmp.gt.f32.partialorder %v705, 0.0
  %vm1018 = vcmp.gt.f32.partialorder %v708, 0.0
  %vm1019 = vcmp.gt.f32.partialorder %v710, 0.0
  %vm1020 = vcmp.gt.f32.partialorder %v713, 0.0
  %vm1021 = vcmp.gt.f32.partialorder %v715, 0.0
  %vm1022 = vcmp.gt.f32.partialorder %v718, 0.0
  %vm1023 = vcmp.gt.f32.partialorder %v720, 0.0
  %vm1024 = vcmp.gt.f32.partialorder %v723, 0.0
  %vm1025 = vcmp.gt.f32.partialorder %v725, 0.0
  %vm1026 = vcmp.gt.f32.partialorder %v728, 0.0
  %vm1027 = vcmp.gt.f32.partialorder %v730, 0.0
  %vm1028 = vcmp.gt.f32.partialorder %v733, 0.0
  %vm1029 = vcmp.gt.f32.partialorder %v735, 0.0
  %vm1030 = vcmp.gt.f32.partialorder %v738, 0.0
  %vm1031 = vcmp.gt.f32.partialorder %v740, 0.0
  %vm1032 = vcmp.gt.f32.partialorder %v743, 0.0
  %vm1033 = vcmp.gt.f32.partialorder %v745, 0.0
  %vm1034 = vcmp.gt.f32.partialorder %v748, 0.0
  %vm1035 = vcmp.gt.f32.partialorder %v750, 0.0
  %vm1036 = vcmp.gt.f32.partialorder %v753, 0.0
  %vm1037 = vcmp.gt.f32.partialorder %v755, 0.0
  %vm1038 = vcmp.gt.f32.partialorder %v758, 0.0
  %vm1039 = vcmp.gt.f32.partialorder %v760, 0.0
  %vm1040 = vcmp.gt.f32.partialorder %v763, 0.0
  %vm1041 = vcmp.gt.f32.partialorder %v765, 0.0
  %vm1042 = vcmp.gt.f32.partialorder %v768, 0.0
  %vm1043 = vcmp.gt.f32.partialorder %v770, 0.0
  %vm1044 = vcmp.gt.f32.partialorder %v773, 0.0
  %vm1045 = vcmp.gt.f32.partialorder %v775, 0.0
  %vm1046 = vcmp.gt.f32.partialorder %v778, 0.0
  %vm1047 = vcmp.gt.f32.partialorder %v780, 0.0
  %vm1048 = vcmp.gt.f32.partialorder %v783, 0.0
  %vm1049 = vcmp.gt.f32.partialorder %v785, 0.0
  %vm1050 = vcmp.gt.f32.partialorder %v788, 0.0
  %vm1051 = vcmp.gt.f32.partialorder %v790, 0.0
  %vm1052 = vcmp.gt.f32.partialorder %v793, 0.0
  %vm1053 = vcmp.gt.f32.partialorder %v795, 0.0
  %vm1054 = vcmp.gt.f32.partialorder %v798, 0.0
  %vm1055 = vcmp.gt.f32.partialorder %v800, 0.0
  %vm1056 = vcmp.gt.f32.partialorder %v803, 0.0
  %vm1057 = vcmp.gt.f32.partialorder %v805, 0.0
  %vm1058 = vcmp.gt.f32.partialorder %v808, 0.0
  %vm1059 = vcmp.gt.f32.partialorder %v810, 0.0
  %vm1060 = vcmp.gt.f32.partialorder %v813, 0.0
  %vm1061 = vcmp.gt.f32.partialorder %v815, 0.0
  %vm1062 = vcmp.gt.f32.partialorder %v818, 0.0
  %vm1063 = vcmp.gt.f32.partialorder %v820, 0.0
  %vm1064 = vcmp.gt.f32.partialorder %v823, 0.0
  %vm1065 = vcmp.gt.f32.partialorder %v825, 0.0
  %vm1066 = vcmp.gt.f32.partialorder %v828, 0.0
  %vm1067 = vcmp.gt.f32.partialorder %v830, 0.0
  %vm1068 = vcmp.gt.f32.partialorder %v833, 0.0
  %vm1069 = vcmp.gt.f32.partialorder %v835, 0.0
  %vm1070 = vcmp.gt.f32.partialorder %v838, 0.0
  %vm1071 = vcmp.gt.f32.partialorder %v840, 0.0
  %vm1072 = vcmp.gt.f32.partialorder %v843, 0.0
  %vm1073 = vcmp.gt.f32.partialorder %v845, 0.0
  %vm1074 = vcmp.gt.f32.partialorder %v848, 0.0
  %vm1075 = vcmp.gt.f32.partialorder %v850, 0.0
  %vm1076 = vcmp.gt.f32.partialorder %v853, 0.0
  %vm1077 = vcmp.gt.f32.partialorder %v855, 0.0
  %vm1078 = vcmp.gt.f32.partialorder %v858, 0.0
  %vm1079 = vcmp.gt.f32.partialorder %v860, 0.0
  %vm1080 = vcmp.gt.f32.partialorder %v863, 0.0
  %vm1081 = vcmp.gt.f32.partialorder %v865, 0.0
  %vm1082 = vcmp.gt.f32.partialorder %v868, 0.0
  %vm1083 = vcmp.gt.f32.partialorder %v870, 0.0
  %vm1084 = vcmp.gt.f32.partialorder %v873, 0.0
  %vm1085 = vcmp.gt.f32.partialorder %v875, 0.0
  %vm1086 = vcmp.gt.f32.partialorder %v878, 0.0
  %vm1087 = vcmp.gt.f32.partialorder %v880, 0.0
  %vm1088 = vcmp.gt.f32.partialorder %v883, 0.0
  %vm1089 = vcmp.gt.f32.partialorder %v885, 0.0
  %vm1090 = vcmp.gt.f32.partialorder %v888, 0.0
  %vm1091 = vcmp.gt.f32.partialorder %v890, 0.0
  %vm1092 = vcmp.gt.f32.partialorder %v893, 0.0
  %vm1093 = vcmp.gt.f32.partialorder %v895, 0.0
  %vm1094 = vcmp.gt.f32.partialorder %v898, 0.0
  %vm1095 = vcmp.gt.f32.partialorder %v900, 0.0
  %vm1096 = vcmp.gt.f32.partialorder %v903, 0.0
  %vm1097 = vcmp.gt.f32.partialorder %v905, 0.0
  %vm1098 = vcmp.gt.f32.partialorder %v908, 0.0
  %vm1099 = vcmp.gt.f32.partialorder %v910, 0.0
  %vm1100 = vcmp.gt.f32.partialorder %v913, 0.0
  %vm1101 = vcmp.gt.f32.partialorder %v915, 0.0
  %vm1102 = vcmp.gt.f32.partialorder %v918, 0.0
  %vm1103 = vcmp.gt.f32.partialorder %v920, 0.0
  %vm1104 = vcmp.gt.f32.partialorder %v923, 0.0
  %vm1105 = vcmp.gt.f32.partialorder %v925, 0.0
  %vm1106 = vcmp.gt.f32.partialorder %v928, 0.0
  %vm1107 = vcmp.gt.f32.partialorder %v930, 0.0
  %vm1108 = vcmp.gt.f32.partialorder %v933, 0.0
  %vm1109 = vcmp.gt.f32.partialorder %v935, 0.0
  %vm1110 = vcmp.gt.f32.partialorder %v938, 0.0
  %vm1111 = vcmp.gt.f32.partialorder %v940, 0.0
  %vm1112 = vcmp.gt.f32.partialorder %v943, 0.0
  %vm1113 = vcmp.gt.f32.partialorder %v945, 0.0
  %vm1114 = vcmp.gt.f32.partialorder %v948, 0.0
  %vm1115 = vcmp.gt.f32.partialorder %v950, 0.0
  %vm1116 = vcmp.gt.f32.partialorder %v953, 0.0
  %vm1117 = vcmp.gt.f32.partialorder %v955, 0.0
  %vm1118 = vcmp.gt.f32.partialorder %v958, 0.0
  %vm1119 = vcmp.gt.f32.partialorder %v960, 0.0
  %vm1120 = vcmp.gt.f32.partialorder %v963, 0.0
  %vm1121 = vcmp.gt.f32.partialorder %v965, 0.0
  %vm1122 = vcmp.gt.f32.partialorder %v968, 0.0
  %vm1123 = vcmp.gt.f32.partialorder %v970, 0.0
  %vm1124 = vcmp.gt.f32.partialorder %v973, 0.0
  %vm1125 = vcmp.gt.f32.partialorder %v975, 0.0
  %vm1126 = vcmp.gt.f32.partialorder %v978, 0.0
  %vm1127 = vcmp.gt.f32.partialorder %v980, 0.0
  %vm1128 = vcmp.gt.f32.partialorder %v983, 0.0
  %vm1129 = vcmp.gt.f32.partialorder %v985, 0.0
  %vm1130 = vcmp.gt.f32.partialorder %v988, 0.0
  %vm1131 = vcmp.gt.f32.partialorder %v990, 0.0
  %vm1132 = vcmp.gt.f32.partialorder %v993, 0.0
  %vm1133 = vcmp.gt.f32.partialorder %v995, 0.0
  %vm1134 = vcmp.gt.f32.partialorder %v998, 0.0
  %vm1135 = vcmp.gt.f32.partialorder %v1000, 0.0
  %vm1136 = vcmp.gt.f32.partialorder %v1003, 0.0
  %vm1137 = vcmp.gt.f32.partialorder %v1005, 0.0
  %vm1138 = vcmp.gt.f32.partialorder %v1008, 0.0
  %vm1139 = vcmp.gt.f32.partialorder %v1010, 0.0
  %v1140 = vmul.f32 %v693, 0.01
  %v1141 = vmul.f32 %v695, 0.01
  %v1142 = vmul.f32 %v698, 0.01
  %v1143 = vmul.f32 %v700, 0.01
  %v1144 = vmul.f32 %v703, 0.01
  %v1145 = vmul.f32 %v705, 0.01
  %v1146 = vmul.f32 %v708, 0.01
  %v1147 = vmul.f32 %v710, 0.01
  %v1148 = vmul.f32 %v713, 0.01
  %v1149 = vmul.f32 %v715, 0.01
  %v1150 = vmul.f32 %v718, 0.01
  %v1151 = vmul.f32 %v720, 0.01
  %v1152 = vmul.f32 %v723, 0.01
  %v1153 = vmul.f32 %v725, 0.01
  %v1154 = vmul.f32 %v728, 0.01
  %v1155 = vmul.f32 %v730, 0.01
  %v1156 = vmul.f32 %v733, 0.01
  %v1157 = vmul.f32 %v735, 0.01
  %v1158 = vmul.f32 %v738, 0.01
  %v1159 = vmul.f32 %v740, 0.01
  %v1160 = vmul.f32 %v743, 0.01
  %v1161 = vmul.f32 %v745, 0.01
  %v1162 = vmul.f32 %v748, 0.01
  %v1163 = vmul.f32 %v750, 0.01
  %v1164 = vmul.f32 %v753, 0.01
  %v1165 = vmul.f32 %v755, 0.01
  %v1166 = vmul.f32 %v758, 0.01
  %v1167 = vmul.f32 %v760, 0.01
  %v1168 = vmul.f32 %v763, 0.01
  %v1169 = vmul.f32 %v765, 0.01
  %v1170 = vmul.f32 %v768, 0.01
  %v1171 = vmul.f32 %v770, 0.01
  %v1172 = vmul.f32 %v773, 0.01
  %v1173 = vmul.f32 %v775, 0.01
  %v1174 = vmul.f32 %v778, 0.01
  %v1175 = vmul.f32 %v780, 0.01
  %v1176 = vmul.f32 %v783, 0.01
  %v1177 = vmul.f32 %v785, 0.01
  %v1178 = vmul.f32 %v788, 0.01
  %v1179 = vmul.f32 %v790, 0.01
  %v1180 = vmul.f32 %v793, 0.01
  %v1181 = vmul.f32 %v795, 0.01
  %v1182 = vmul.f32 %v798, 0.01
  %v1183 = vmul.f32 %v800, 0.01
  %v1184 = vmul.f32 %v803, 0.01
  %v1185 = vmul.f32 %v805, 0.01
  %v1186 = vmul.f32 %v808, 0.01
  %v1187 = vmul.f32 %v810, 0.01
  %v1188 = vmul.f32 %v813, 0.01
  %v1189 = vmul.f32 %v815, 0.01
  %v1190 = vmul.f32 %v818, 0.01
  %v1191 = vmul.f32 %v820, 0.01
  %v1192 = vmul.f32 %v823, 0.01
  %v1193 = vmul.f32 %v825, 0.01
  %v1194 = vmul.f32 %v828, 0.01
  %v1195 = vmul.f32 %v830, 0.01
  %v1196 = vmul.f32 %v833, 0.01
  %v1197 = vmul.f32 %v835, 0.01
  %v1198 = vmul.f32 %v838, 0.01
  %v1199 = vmul.f32 %v840, 0.01
  %v1200 = vmul.f32 %v843, 0.01
  %v1201 = vmul.f32 %v845, 0.01
  %v1202 = vmul.f32 %v848, 0.01
  %v1203 = vmul.f32 %v850, 0.01
  %v1204 = vmul.f32 %v853, 0.01
  %v1205 = vmul.f32 %v855, 0.01
  %v1206 = vmul.f32 %v858, 0.01
  %v1207 = vmul.f32 %v860, 0.01
  %v1208 = vmul.f32 %v863, 0.01
  %v1209 = vmul.f32 %v865, 0.01
  %v1210 = vmul.f32 %v868, 0.01
  %v1211 = vmul.f32 %v870, 0.01
  %v1212 = vmul.f32 %v873, 0.01
  %v1213 = vmul.f32 %v875, 0.01
  %v1214 = vmul.f32 %v878, 0.01
  %v1215 = vmul.f32 %v880, 0.01
  %v1216 = vmul.f32 %v883, 0.01
  %v1217 = vmul.f32 %v885, 0.01
  %v1218 = vmul.f32 %v888, 0.01
  %v1219 = vmul.f32 %v890, 0.01
  %v1220 = vmul.f32 %v893, 0.01
  %v1221 = vmul.f32 %v895, 0.01
  %v1222 = vmul.f32 %v898, 0.01
  %v1223 = vmul.f32 %v900, 0.01
  %v1224 = vmul.f32 %v903, 0.01
  %v1225 = vmul.f32 %v905, 0.01
  %v1226 = vmul.f32 %v908, 0.01
  %v1227 = vmul.f32 %v910, 0.01
  %v1228 = vmul.f32 %v913, 0.01
  %v1229 = vmul.f32 %v915, 0.01
  %v1230 = vmul.f32 %v918, 0.01
  %v1231 = vmul.f32 %v920, 0.01
  %v1232 = vmul.f32 %v923, 0.01
  %v1233 = vmul.f32 %v925, 0.01
  %v1234 = vmul.f32 %v928, 0.01
  %v1235 = vmul.f32 %v930, 0.01
  %v1236 = vmul.f32 %v933, 0.01
  %v1237 = vmul.f32 %v935, 0.01
  %v1238 = vmul.f32 %v938, 0.01
  %v1239 = vmul.f32 %v940, 0.01
  %v1240 = vmul.f32 %v943, 0.01
  %v1241 = vmul.f32 %v945, 0.01
  %v1242 = vmul.f32 %v948, 0.01
  %v1243 = vmul.f32 %v950, 0.01
  %v1244 = vmul.f32 %v953, 0.01
  %v1245 = vmul.f32 %v955, 0.01
  %v1246 = vmul.f32 %v958, 0.01
  %v1247 = vmul.f32 %v960, 0.01
  %v1248 = vmul.f32 %v963, 0.01
  %v1249 = vmul.f32 %v965, 0.01
  %v1250 = vmul.f32 %v968, 0.01
  %v1251 = vmul.f32 %v970, 0.01
  %v1252 = vmul.f32 %v973, 0.01
  %v1253 = vmul.f32 %v975, 0.01
  %v1254 = vmul.f32 %v978, 0.01
  %v1255 = vmul.f32 %v980, 0.01
  %v1256 = vmul.f32 %v983, 0.01
  %v1257 = vmul.f32 %v985, 0.01
  %v1258 = vmul.f32 %v988, 0.01
  %v1259 = vmul.f32 %v990, 0.01
  %v1260 = vmul.f32 %v993, 0.01
  %v1261 = vmul.f32 %v995, 0.01
  %v1262 = vmul.f32 %v998, 0.01
  %v1263 = vmul.f32 %v1000, 0.01
  %v1264 = vmul.f32 %v1003, 0.01
  %v1265 = vmul.f32 %v1005, 0.01
  %v1266 = vmul.f32 %v1008, 0.01
  %v1267 = vmul.f32 %v1010, 0.01
  %v1268 = vsel %vm1012, %v693, %v1140
  %v1269 = vsel %vm1013, %v695, %v1141
  %v1270 = vsel %vm1014, %v698, %v1142
  %v1271 = vsel %vm1015, %v700, %v1143
  %v1272 = vsel %vm1016, %v703, %v1144
  %v1273 = vsel %vm1017, %v705, %v1145
  %v1274 = vsel %vm1018, %v708, %v1146
  %v1275 = vsel %vm1019, %v710, %v1147
  %v1276 = vsel %vm1020, %v713, %v1148
  %v1277 = vsel %vm1021, %v715, %v1149
  %v1278 = vsel %vm1022, %v718, %v1150
  %v1279 = vsel %vm1023, %v720, %v1151
  %v1280 = vsel %vm1024, %v723, %v1152
  %v1281 = vsel %vm1025, %v725, %v1153
  %v1282 = vsel %vm1026, %v728, %v1154
  %v1283 = vsel %vm1027, %v730, %v1155
  %v1284 = vsel %vm1028, %v733, %v1156
  %v1285 = vsel %vm1029, %v735, %v1157
  %v1286 = vsel %vm1030, %v738, %v1158
  %v1287 = vsel %vm1031, %v740, %v1159
  %v1288 = vsel %vm1032, %v743, %v1160
  %v1289 = vsel %vm1033, %v745, %v1161
  %v1290 = vsel %vm1034, %v748, %v1162
  %v1291 = vsel %vm1035, %v750, %v1163
  %v1292 = vsel %vm1036, %v753, %v1164
  %v1293 = vsel %vm1037, %v755, %v1165
  %v1294 = vsel %vm1038, %v758, %v1166
  %v1295 = vsel %vm1039, %v760, %v1167
  %v1296 = vsel %vm1040, %v763, %v1168
  %v1297 = vsel %vm1041, %v765, %v1169
  %v1298 = vsel %vm1042, %v768, %v1170
  %v1299 = vsel %vm1043, %v770, %v1171
  %v1300 = vsel %vm1044, %v773, %v1172
  %v1301 = vsel %vm1045, %v775, %v1173
  %v1302 = vsel %vm1046, %v778, %v1174
  %v1303 = vsel %vm1047, %v780, %v1175
  %v1304 = vsel %vm1048, %v783, %v1176
  %v1305 = vsel %vm1049, %v785, %v1177
  %v1306 = vsel %vm1050, %v788, %v1178
  %v1307 = vsel %vm1051, %v790, %v1179
  %v1308 = vsel %vm1052, %v793, %v1180
  %v1309 = vsel %vm1053, %v795, %v1181
  %v1310 = vsel %vm1054, %v798, %v1182
  %v1311 = vsel %vm1055, %v800, %v1183
  %v1312 = vsel %vm1056, %v803, %v1184
  %v1313 = vsel %vm1057, %v805, %v1185
  %v1314 = vsel %vm1058, %v808, %v1186
  %v1315 = vsel %vm1059, %v810, %v1187
  %v1316 = vsel %vm1060, %v813, %v1188
  %v1317 = vsel %vm1061, %v815, %v1189
  %v1318 = vsel %vm1062, %v818, %v1190
  %v1319 = vsel %vm1063, %v820, %v1191
  %v1320 = vsel %vm1064, %v823, %v1192
  %v1321 = vsel %vm1065, %v825, %v1193
  %v1322 = vsel %vm1066, %v828, %v1194
  %v1323 = vsel %vm1067, %v830, %v1195
  %v1324 = vsel %vm1068, %v833, %v1196
  %v1325 = vsel %vm1069, %v835, %v1197
  %v1326 = vsel %vm1070, %v838, %v1198
  %v1327 = vsel %vm1071, %v840, %v1199
  %v1328 = vsel %vm1072, %v843, %v1200
  %v1329 = vsel %vm1073, %v845, %v1201
  %v1330 = vsel %vm1074, %v848, %v1202
  %v1331 = vsel %vm1075, %v850, %v1203
  %v1332 = vsel %vm1076, %v853, %v1204
  %v1333 = vsel %vm1077, %v855, %v1205
  %v1334 = vsel %vm1078, %v858, %v1206
  %v1335 = vsel %vm1079, %v860, %v1207
  %v1336 = vsel %vm1080, %v863, %v1208
  %v1337 = vsel %vm1081, %v865, %v1209
  %v1338 = vsel %vm1082, %v868, %v1210
  %v1339 = vsel %vm1083, %v870, %v1211
  %v1340 = vsel %vm1084, %v873, %v1212
  %v1341 = vsel %vm1085, %v875, %v1213
  %v1342 = vsel %vm1086, %v878, %v1214
  %v1343 = vsel %vm1087, %v880, %v1215
  %v1344 = vsel %vm1088, %v883, %v1216
  %v1345 = vsel %vm1089, %v885, %v1217
  %v1346 = vsel %vm1090, %v888, %v1218
  %v1347 = vsel %vm1091, %v890, %v1219
  %v1348 = vsel %vm1092, %v893, %v1220
  %v1349 = vsel %vm1093, %v895, %v1221
  %v1350 = vsel %vm1094, %v898, %v1222
  %v1351 = vsel %vm1095, %v900, %v1223
  %v1352 = vsel %vm1096, %v903, %v1224
  %v1353 = vsel %vm1097, %v905, %v1225
  %v1354 = vsel %vm1098, %v908, %v1226
  %v1355 = vsel %vm1099, %v910, %v1227
  %v1356 = vsel %vm1100, %v913, %v1228
  %v1357 = vsel %vm1101, %v915, %v1229
  %v1358 = vsel %vm1102, %v918, %v1230
  %v1359 = vsel %vm1103, %v920, %v1231
  %v1360 = vsel %vm1104, %v923, %v1232
  %v1361 = vsel %vm1105, %v925, %v1233
  %v1362 = vsel %vm1106, %v928, %v1234
  %v1363 = vsel %vm1107, %v930, %v1235
  %v1364 = vsel %vm1108, %v933, %v1236
  %v1365 = vsel %vm1109, %v935, %v1237
  %v1366 = vsel %vm1110, %v938, %v1238
  %v1367 = vsel %vm1111, %v940, %v1239
  %v1368 = vsel %vm1112, %v943, %v1240
  %v1369 = vsel %vm1113, %v945, %v1241
  %v1370 = vsel %vm1114, %v948, %v1242
  %v1371 = vsel %vm1115, %v950, %v1243
  %v1372 = vsel %vm1116, %v953, %v1244
  %v1373 = vsel %vm1117, %v955, %v1245
  %v1374 = vsel %vm1118, %v958, %v1246
  %v1375 = vsel %vm1119, %v960, %v1247
  %v1376 = vsel %vm1120, %v963, %v1248
  %v1377 = vsel %vm1121, %v965, %v1249
  %v1378 = vsel %vm1122, %v968, %v1250
  %v1379 = vsel %vm1123, %v970, %v1251
  %v1380 = vsel %vm1124, %v973, %v1252
  %v1381 = vsel %vm1125, %v975, %v1253
  %v1382 = vsel %vm1126, %v978, %v1254
  %v1383 = vsel %vm1127, %v980, %v1255
  %v1384 = vsel %vm1128, %v983, %v1256
  %v1385 = vsel %vm1129, %v985, %v1257
  %v1386 = vsel %vm1130, %v988, %v1258
  %v1387 = vsel %vm1131, %v990, %v1259
  %v1388 = vsel %vm1132, %v993, %v1260
  %v1389 = vsel %vm1133, %v995, %v1261
  %v1390 = vsel %vm1134, %v998, %v1262
  %v1391 = vsel %vm1135, %v1000, %v1263
  %v1392 = vsel %vm1136, %v1003, %v1264
  %v1393 = vsel %vm1137, %v1005, %v1265
  %v1394 = vsel %vm1138, %v1008, %v1266
  %v1395 = vsel %vm1139, %v1010, %v1267
  %v1396 = vld [vmem:[%s3] sm:$0xff]
  %1397 = vmatpush.xpose.msra.mxu0 %v1283
  %1398 = vmatpush.xpose.msra.mxu0 %v1282
  %1399 = vmatpush.xpose.msra.mxu0 %v1281
  %1400 = vmatpush.xpose.msra.mxu0 %v1280
  %1401 = vmatpush.xpose.msra.mxu0 %v1279
  %1402 = vmatpush.xpose.msra.mxu0 %v1278
  %1403 = vmatpush.xpose.msra.mxu0 %v1277
  %1404 = vmatpush.xpose.msra.mxu0 %v1276
  %1405 = vmatpush.xpose.msra.mxu0 %v1275
  %1406 = vmatpush.xpose.msra.mxu0 %v1274
  %1407 = vmatpush.xpose.msra.mxu0 %v1273
  %1408 = vmatpush.xpose.msra.mxu0 %v1272
  %1409 = vmatpush.xpose.msra.mxu0 %v1271
  %1410 = vmatpush.xpose.msra.mxu0 %v1270
  %1411 = vmatpush.xpose.msra.mxu0 %v1269
  %1412 = vmatpush.xpose.msra.mxu0 %v1268
  %1413 = vmatmul.f32.gmra.mxu0 %v1396
  %v1414 = vpop.f32.mrf.mxu0
  %v1415 = vadd.f32 0.0, %v1414
  %1416 = vdwg.mxu0
  %1417 = vmatpush.xpose.msra.mxu0 %v1299
  %1418 = vmatpush.xpose.msra.mxu0 %v1298
  %1419 = vmatpush.xpose.msra.mxu0 %v1297
  %1420 = vmatpush.xpose.msra.mxu0 %v1296
  %1421 = vmatpush.xpose.msra.mxu0 %v1295
  %1422 = vmatpush.xpose.msra.mxu0 %v1294
  %1423 = vmatpush.xpose.msra.mxu0 %v1293
  %1424 = vmatpush.xpose.msra.mxu0 %v1292
  %1425 = vmatpush.xpose.msra.mxu0 %v1291
  %1426 = vmatpush.xpose.msra.mxu0 %v1290
  %1427 = vmatpush.xpose.msra.mxu0 %v1289
  %1428 = vmatpush.xpose.msra.mxu0 %v1288
  %1429 = vmatpush.xpose.msra.mxu0 %v1287
  %1430 = vmatpush.xpose.msra.mxu0 %v1286
  %1431 = vmatpush.xpose.msra.mxu0 %v1285
  %1432 = vmatpush.xpose.msra.mxu0 %v1284
  %1433 = vmatmul.f32.gmra.mxu0 %v1396
  %v1434 = vpop.f32.mrf.mxu0
  %v1435 = vadd.f32 0.0, %v1434
  %1436 = vdwg.mxu0
  %1437 = vmatpush.xpose.msra.mxu0 %v1315
  %1438 = vmatpush.xpose.msra.mxu0 %v1314
  %1439 = vmatpush.xpose.msra.mxu0 %v1313
  %1440 = vmatpush.xpose.msra.mxu0 %v1312
  %1441 = vmatpush.xpose.msra.mxu0 %v1311
  %1442 = vmatpush.xpose.msra.mxu0 %v1310
  %1443 = vmatpush.xpose.msra.mxu0 %v1309
  %1444 = vmatpush.xpose.msra.mxu0 %v1308
  %1445 = vmatpush.xpose.msra.mxu0 %v1307
  %1446 = vmatpush.xpose.msra.mxu0 %v1306
  %1447 = vmatpush.xpose.msra.mxu0 %v1305
  %1448 = vmatpush.xpose.msra.mxu0 %v1304
  %1449 = vmatpush.xpose.msra.mxu0 %v1303
  %1450 = vmatpush.xpose.msra.mxu0 %v1302
  %1451 = vmatpush.xpose.msra.mxu0 %v1301
  %1452 = vmatpush.xpose.msra.mxu0 %v1300
  %1453 = vmatmul.f32.gmra.mxu0 %v1396
  %v1454 = vpop.f32.mrf.mxu0
  %v1455 = vadd.f32 0.0, %v1454
  %1456 = vdwg.mxu0
  %1457 = vmatpush.xpose.msra.mxu0 %v1331
  %1458 = vmatpush.xpose.msra.mxu0 %v1330
  %1459 = vmatpush.xpose.msra.mxu0 %v1329
  %1460 = vmatpush.xpose.msra.mxu0 %v1328
  %1461 = vmatpush.xpose.msra.mxu0 %v1327
  %1462 = vmatpush.xpose.msra.mxu0 %v1326
  %1463 = vmatpush.xpose.msra.mxu0 %v1325
  %1464 = vmatpush.xpose.msra.mxu0 %v1324
  %1465 = vmatpush.xpose.msra.mxu0 %v1323
  %1466 = vmatpush.xpose.msra.mxu0 %v1322
  %1467 = vmatpush.xpose.msra.mxu0 %v1321
  %1468 = vmatpush.xpose.msra.mxu0 %v1320
  %1469 = vmatpush.xpose.msra.mxu0 %v1319
  %1470 = vmatpush.xpose.msra.mxu0 %v1318
  %1471 = vmatpush.xpose.msra.mxu0 %v1317
  %1472 = vmatpush.xpose.msra.mxu0 %v1316
  %1473 = vmatmul.f32.gmra.mxu0 %v1396
  %v1474 = vpop.f32.mrf.mxu0
  %v1475 = vadd.f32 0.0, %v1474
  %1476 = vdwg.mxu0
  %1477 = vmatpush.xpose.msra.mxu0 %v1347
  %1478 = vmatpush.xpose.msra.mxu0 %v1346
  %1479 = vmatpush.xpose.msra.mxu0 %v1345
  %1480 = vmatpush.xpose.msra.mxu0 %v1344
  %1481 = vmatpush.xpose.msra.mxu0 %v1343
  %1482 = vmatpush.xpose.msra.mxu0 %v1342
  %1483 = vmatpush.xpose.msra.mxu0 %v1341
  %1484 = vmatpush.xpose.msra.mxu0 %v1340
  %1485 = vmatpush.xpose.msra.mxu0 %v1339
  %1486 = vmatpush.xpose.msra.mxu0 %v1338
  %1487 = vmatpush.xpose.msra.mxu0 %v1337
  %1488 = vmatpush.xpose.msra.mxu0 %v1336
  %1489 = vmatpush.xpose.msra.mxu0 %v1335
  %1490 = vmatpush.xpose.msra.mxu0 %v1334
  %1491 = vmatpush.xpose.msra.mxu0 %v1333
  %1492 = vmatpush.xpose.msra.mxu0 %v1332
  %1493 = vmatmul.f32.gmra.mxu0 %v1396
  %v1494 = vpop.f32.mrf.mxu0
  %v1495 = vadd.f32 0.0, %v1494
  %1496 = vdwg.mxu0
  %1497 = vmatpush.xpose.msra.mxu0 %v1363
  %1498 = vmatpush.xpose.msra.mxu0 %v1362
  %1499 = vmatpush.xpose.msra.mxu0 %v1361
  %1500 = vmatpush.xpose.msra.mxu0 %v1360
  %1501 = vmatpush.xpose.msra.mxu0 %v1359
  %1502 = vmatpush.xpose.msra.mxu0 %v1358
  %1503 = vmatpush.xpose.msra.mxu0 %v1357
  %1504 = vmatpush.xpose.msra.mxu0 %v1356
  %1505 = vmatpush.xpose.msra.mxu0 %v1355
  %1506 = vmatpush.xpose.msra.mxu0 %v1354
  %1507 = vmatpush.xpose.msra.mxu0 %v1353
  %1508 = vmatpush.xpose.msra.mxu0 %v1352
  %1509 = vmatpush.xpose.msra.mxu0 %v1351
  %1510 = vmatpush.xpose.msra.mxu0 %v1350
  %1511 = vmatpush.xpose.msra.mxu0 %v1349
  %1512 = vmatpush.xpose.msra.mxu0 %v1348
  %1513 = vmatmul.f32.gmra.mxu0 %v1396
  %v1514 = vpop.f32.mrf.mxu0
  %v1515 = vadd.f32 0.0, %v1514
  %1516 = vdwg.mxu0
  %1517 = vmatpush.xpose.msra.mxu0 %v1379
  %1518 = vmatpush.xpose.msra.mxu0 %v1378
  %1519 = vmatpush.xpose.msra.mxu0 %v1377
  %1520 = vmatpush.xpose.msra.mxu0 %v1376
  %1521 = vmatpush.xpose.msra.mxu0 %v1375
  %1522 = vmatpush.xpose.msra.mxu0 %v1374
  %1523 = vmatpush.xpose.msra.mxu0 %v1373
  %1524 = vmatpush.xpose.msra.mxu0 %v1372
  %1525 = vmatpush.xpose.msra.mxu0 %v1371
  %1526 = vmatpush.xpose.msra.mxu0 %v1370
  %1527 = vmatpush.xpose.msra.mxu0 %v1369
  %1528 = vmatpush.xpose.msra.mxu0 %v1368
  %1529 = vmatpush.xpose.msra.mxu0 %v1367
  %1530 = vmatpush.xpose.msra.mxu0 %v1366
  %1531 = vmatpush.xpose.msra.mxu0 %v1365
  %1532 = vmatpush.xpose.msra.mxu0 %v1364
  %1533 = vmatmul.f32.gmra.mxu0 %v1396
  %v1534 = vpop.f32.mrf.mxu0
  %v1535 = vadd.f32 0.0, %v1534
  %1536 = vdwg.mxu0
  %1537 = vmatpush.xpose.msra.mxu0 %v1395
  %1538 = vmatpush.xpose.msra.mxu0 %v1394
  %1539 = vmatpush.xpose.msra.mxu0 %v1393
  %1540 = vmatpush.xpose.msra.mxu0 %v1392
  %1541 = vmatpush.xpose.msra.mxu0 %v1391
  %1542 = vmatpush.xpose.msra.mxu0 %v1390
  %1543 = vmatpush.xpose.msra.mxu0 %v1389
  %1544 = vmatpush.xpose.msra.mxu0 %v1388
  %1545 = vmatpush.xpose.msra.mxu0 %v1387
  %1546 = vmatpush.xpose.msra.mxu0 %v1386
  %1547 = vmatpush.xpose.msra.mxu0 %v1385
  %1548 = vmatpush.xpose.msra.mxu0 %v1384
  %1549 = vmatpush.xpose.msra.mxu0 %v1383
  %1550 = vmatpush.xpose.msra.mxu0 %v1382
  %1551 = vmatpush.xpose.msra.mxu0 %v1381
  %1552 = vmatpush.xpose.msra.mxu0 %v1380
  %1553 = vmatmul.f32.gmra.mxu0 %v1396
  %v1554 = vpop.f32.mrf.mxu0
  %v1555 = vadd.f32 0.0, %v1554
  %1556 = vdwg.mxu0
  %s1557 = sld [smem:[#allocation2]]
  %v1558 = vstv %s1557
  %v1559 = vadd.f32 %v1415, %v1558
  %v1560 = vadd.f32 %v1435, %v1558
  %v1561 = vadd.f32 %v1455, %v1558
  %v1562 = vadd.f32 %v1475, %v1558
  %v1563 = vadd.f32 %v1495, %v1558
  %v1564 = vadd.f32 %v1515, %v1558
  %v1565 = vadd.f32 %v1535, %v1558
  %v1566 = vadd.f32 %v1555, %v1558
  %v1575 = vrot.slane %v1560, 7
  %v1576 = vrot.slane %v1561, 6
  %v1577 = vrot.slane %v1562, 5
  %v1578 = vrot.slane %v1563, 4
  %v1579 = vrot.slane %v1564, 3
  %v1580 = vrot.slane %v1565, 2
  %v1581 = vrot.slane %v1566, 1
  %vm1582 = vcmask 1040384
  %v1583 = vsel %vm1582, %v1559, %v1575
  %vm1584 = vcmask 1042434
  %v1585 = vsel %vm1584, %v1576, %v1577
  %vm1586 = vcmask 1041408
  %v1587 = vsel %vm1586, %v1583, %v1585
  %vm1588 = vcmask 1044484
  %v1589 = vsel %vm1588, %v1578, %v1579
  %vm1590 = vcmask 1046534
  %v1591 = vsel %vm1590, %v1580, %v1581
  %vm1592 = vcmask 1045508
  %v1593 = vsel %vm1592, %v1589, %v1591
  %vm1594 = vcmask 1043456
  %v1595 = vsel %vm1594, %v1587, %v1593
  %1597 = vst [vmem:[%s5] sm:$0xff] %v1595
  // Predicated region
  $region22: #{churn_forward.1} parent=0 // pred_check
    _
  $region23: #{churn_forward.1} parent=0 // pred_check_branch
    %1599 = sbr.rel (0) target = $region25
  $region24: #{churn_forward.1} parent=0 // pred_region
    _
  $region25: #{churn_forward.1} parent=0 // pred_fallthru
    _
  // Predicated region
  $region26: #{churn_forward.1} parent=0 // pred_check
    _
  $region27: #{churn_forward.1} parent=0 // pred_check_branch
    %1601 = sbr.rel (0) target = $region29
  $region28: #{churn_forward.1} parent=0 // pred_region
    _
  $region29: #{churn_forward.1} parent=0 // pred_fallthru
    _

</llo_original>
